<compile_context>
chip_gen: v7x
topology: tpu7x:2x2x1
jax: 0.10.0
libtpu: 0.0.40
codegen_flags: <defaults>
</compile_context>

<pallas_src>
import math
from functools import partial

import jax
import jax.numpy as jnp
import numpy as np
from jax.experimental import pallas as pl
from jax.experimental.pallas import tpu as pltpu

RF = 16  # receptive field of conv3 . conv2 . conv1(stride 2) on the input sequence


def _cdiv(a, b):
    return -(-a // b)


# ------------------------------- Pallas kernel -------------------------------

def _model_kernel(idxoff_ref, t_ref, b_ref, o_ref, *, n_taps):
    """One grid step = one batch block = ONE MXU matmul.

    idxoff_ref: (1, M, n_taps) int32 -- per output row (b*L3+t3), the 16 window
                indices idx[2*t3+j], already offset into their tap band (+ j*n_bins).
    t_ref:      (n_taps*n_bins, C3) bf16 -- folded embedding+conv1+conv2+conv3 table.
    b_ref:      (1, C3) f32              -- folded bias.
    o_ref:      (1, M, C3)               -- lane- and sublane-dense output slab.
    """
    m = idxoff_ref.shape[1]
    k = t_ref.shape[0]
    idx = idxoff_ref[0]                                            # (M, n_taps)
    cols = jax.lax.broadcasted_iota(jnp.int32, (m, k), 1)

    # "16-hot" operand: row r selects the 16 table rows of its receptive field;
    # the bands are disjoint so OR == sum, and the MXU adds the selected rows.
    hot = cols == idx[:, 0:1]
    for j in range(1, n_taps):                                     # static unroll (VALU)
        hot = hot | (cols == idx[:, j:j + 1])

    acc = jnp.dot(hot.astype(jnp.bfloat16), t_ref[...],
                  preferred_element_type=jnp.float32) + b_ref[...]
    o_ref[0] = acc.astype(o_ref.dtype)


def transformer_model_forward(curve_shape, params, *, block_b=None,
                              out_dtype=jnp.float32, channels_last=False):
    """curve_shape: (B, 1, L) float (bin indices).  Returns (B, 256, Lout)."""
    B, one, L = curve_shape.shape
    assert one == 1
    L1 = (L - 4) // 2 + 1
    L2 = L1 - 3
    L3 = L2 - 3
    assert L3 >= 1, "sequence too short for the three convs (need L >= 16)"

    t_all, b_all = params["t_all"], params["b_all"]
    K, C3 = t_all.shape
    n_bins = K // RF

    # Window-index plumbing (layout only; all compute stays inside the kernel).
    # idx_off[b, t3, j] = idx[b, 2*t3 + j] + j*n_bins  (band offset pre-folded).
    idx = curve_shape[:, 0, :].astype(jnp.int32)                   # (B, L)
    idx = jnp.clip(idx, 0, n_bins - 1)   # torch embedding would raise on OOB; clamp instead
    pos = 2 * jnp.arange(L3)[:, None] + jnp.arange(RF)[None, :]    # (L3, RF)
    band = (jnp.arange(RF) * n_bins).astype(jnp.int32)
    idx_off = idx[:, pos] + band[None, None, :]                    # (B, L3, RF)

    # ---- batch blocking -------------------------------------------------------
    if block_b is None:
        out_bytes = jnp.dtype(out_dtype).itemsize
        # Per-batch-element VMEM (double-buffered out + idx block + transient one-hot).
        per_b = L3 * (C3 * out_bytes * 2 + K * 2 + 128 * 4 * 2)
        bt_vmem = max(1, (10 << 20) // max(per_b, 1))   # stay under v5e's 16 MiB scoped default
        bt_mxu = max(1, _cdiv(512, L3))                 # ~512 stacked rows is plenty of MXU fill
        block_b = min(B, bt_vmem, bt_mxu)
    Bt = max(1, min(block_b, B))
    n_blk = _cdiv(B, Bt)
    if n_blk > 1 and n_blk % 2:
        # v7x has 2 TensorCores: prefer an even number of grid steps (best effort).
        Bt = _cdiv(B, n_blk + 1)
        n_blk = _cdiv(B, Bt)
    B_pad = n_blk * Bt
    if B_pad != B:
        idx_off = jnp.pad(idx_off, ((0, B_pad - B), (0, 0), (0, 0)))

    M = Bt * L3
    idx_off = idx_off.reshape(n_blk, M, RF)

    out = pl.pallas_call(
        partial(_model_kernel, n_taps=RF),
        out_shape=jax.ShapeDtypeStruct((n_blk, M, C3), out_dtype),
        grid_spec=pltpu.PrefetchScalarGridSpec(
            num_scalar_prefetch=0,
            grid=(n_blk,),
            in_specs=[
                pl.BlockSpec((1, M, RF), lambda i: (i, 0, 0)),     # window indices block
                pl.BlockSpec(t_all.shape, lambda i: (0, 0)),       # folded table, resident
                pl.BlockSpec(b_all.shape, lambda i: (0, 0)),       # folded bias, resident
            ],
            out_specs=pl.BlockSpec((1, M, C3), lambda i: (i, 0, 0)),
        ),
        compiler_params=pltpu.CompilerParams(
            dimension_semantics=("parallel",)),
    )(idx_off, t_all, b_all)

    out = out.reshape(B_pad, L3, C3)[:B]                           # (B, L3, 256), channels-last
    if channels_last:
        return out
    # TODO(synk): drop this transpose if the downstream consumer takes channels-last.
    return jnp.transpose(out, (0, 2, 1))                           # torch layout (B, 256, L3)


# ---------------------------- params & references ----------------------------

def init_params_torch_layout(key, n_bins):
    """Deterministic init, torch-layout weights: Conv1d weight (Cout, Cin, K)."""
    ks = jax.random.split(key, 7)
    emb = jax.random.normal(ks[0], (n_bins, 8), jnp.float32)
    w1 = jax.random.normal(ks[1], (32, 8, 4), jnp.float32) / math.sqrt(8 * 4)
    b1 = jax.random.normal(ks[2], (32,), jnp.float32) * 0.1
    w2 = jax.random.normal(ks[3], (128, 32, 4), jnp.float32) / math.sqrt(32 * 4)
    b2 = jax.random.normal(ks[4], (128,), jnp.float32) * 0.1
    w3 = jax.random.normal(ks[5], (256, 128, 4), jnp.float32) / math.sqrt(128 * 4)
    b3 = jax.random.normal(ks[6], (256,), jnp.float32) * 0.1
    return dict(emb=emb, w1=w1, b1=b1, w2=w2, b2=b2, w3=w3, b3=b3)


def to_kernel_params(p, dim):
    """Torch-layout params -> fully folded single-matmul kernel params.

    Because the forward is linear, output position t3 is
        out[t3] = b_all + sum_{j=0..15} T_all[j, idx[2*t3 + j]]
    with j = 2*(k2 + k3) + k1 ranging over the 16-wide receptive field.
    """
    f32 = jnp.float32
    emb_s = p["emb"].astype(f32) * math.sqrt(dim)                  # (n_bins, 8)
    w1 = p["w1"].astype(f32)                                       # (32, 8, 4)
    w2 = p["w2"].astype(f32)                                       # (128, 32, 4)
    w3 = p["w3"].astype(f32)                                       # (256, 128, 4)
    b1, b2, b3 = (p[k].astype(f32) for k in ("b1", "b2", "b3"))
    n_bins = emb_s.shape[0]
    C3 = w3.shape[0]

    # Embedding folded into conv1 taps: t1[k1, v, o1] = sum_c emb_s[v,c] * w1[o1,c,k1]
    t1 = jnp.einsum('vc,ock->kvo', emb_s, w1)                      # (4, n_bins, 32)
    # conv2 tap k2 composed with conv3 tap k3: w23[k2,k3,o1,o3]
    w23 = jnp.einsum('aik,bal->klib', w2, w3)                      # (4, 4, 32, 256)

    t_all = jnp.zeros((RF, n_bins, C3), f32)
    for k1 in range(4):
        for k2 in range(4):
            for k3 in range(4):
                j = 2 * (k2 + k3) + k1
                t_all = t_all.at[j].add(t1[k1] @ w23[k2, k3])
    t_all = t_all.reshape(RF * n_bins, C3).astype(jnp.bfloat16)    # MXU operand

    # Fold b1/b2 through the downstream convs into one output bias.
    b2eff = b2 + jnp.einsum('aik,i->a', w2, b1)                    # (128,)
    b_all = (b3 + jnp.einsum('bal,a->b', w3, b2eff)).reshape(1, -1).astype(f32)
    return dict(t_all=t_all, b_all=b_all)


def reference_forward_f32(curve_shape, p, dim):
    """Pure f32 re-implementation of the torch forward (semantic reference)."""
    idx = curve_shape[:, 0, :].astype(jnp.int32)                   # (B, L)
    x = p["emb"][idx] * math.sqrt(dim)                             # (B, L, 8)
    x = jnp.transpose(x, (0, 2, 1))                                # (B, 8, L)

    def conv1d(x, w, b, stride):
        _, _, Lin = x.shape
        Cout, _, Kk = w.shape
        Lout = (Lin - Kk) // stride + 1
        cols = jnp.stack(
            [x[:, :, k:k + stride * (Lout - 1) + 1:stride] for k in range(Kk)],
            axis=-1)                                               # (B, Cin, Lout, K)
        return jnp.einsum('bclk,ock->bol', cols, w) + b[None, :, None]

    x = conv1d(x, p["w1"], p["b1"], 2)
    x = conv1d(x, p["w2"], p["b2"], 1)
    x = conv1d(x, p["w3"], p["b3"], 1)
    return x


def reference_forward_matched(curve_shape, kp):
    """Same folded math in plain XLA with the kernel's precision (bf16 table rows,
    f32 accumulation) -- tight-tolerance check of the Pallas lowering itself."""
    f32 = jnp.float32
    t_all = kp["t_all"].astype(f32)                                # (16*n_bins, 256)
    n_bins = t_all.shape[0] // RF
    idx = jnp.clip(curve_shape[:, 0, :].astype(jnp.int32), 0, n_bins - 1)
    _, L = idx.shape
    L3 = ((L - 4) // 2 + 1) - 6
    pos = 2 * jnp.arange(L3)[:, None] + jnp.arange(RF)[None, :]
    rows = idx[:, pos] + (jnp.arange(RF) * n_bins)[None, None, :]  # (B, L3, RF)
    out = t_all[rows].sum(axis=2) + kp["b_all"].astype(f32)        # (B, L3, 256)
    return jnp.transpose(out, (0, 2, 1))


# ----------------------------------- main ------------------------------------

if __name__ == "__main__":
    dim, n_freq, n_bins = 32, 5, 16   # n_freq / bos_token / template unused in forward
    B, L = 2, 16                      # conv lengths: 16 -> 7 -> 4 -> 1

    key = jax.random.PRNGKey(0)
    kp_key, kx_key = jax.random.split(key)
    torch_params = init_params_torch_layout(kp_key, n_bins)
    kernel_params = to_kernel_params(torch_params, dim)

    # curve_shape holds bin indices stored as floats (the torch module calls .long()).
    curve = jax.random.randint(kx_key, (B, 1, L), 0, n_bins).astype(jnp.float32)

    out = transformer_model_forward(curve, kernel_params)
    out = jax.block_until_ready(out)

    L_out = (((L - 4) // 2 + 1) - 3) - 3
    assert out.shape == (B, 256, L_out), out.shape

    # Tight check against a precision-matched (bf16 table / f32 accumulate) reference.
    ref_m = reference_forward_matched(curve, kernel_params)
    np.testing.assert_allclose(np.asarray(out), np.asarray(ref_m), rtol=5e-3, atol=5e-3)

    # Loose sanity check against the pure-f32 torch-semantics reference
    # (slack covers bf16 quantization of the folded table).
    ref = reference_forward_f32(curve, torch_params, dim)
    np.testing.assert_allclose(np.asarray(out), np.asarray(ref), rtol=1e-1, atol=5e-1)

    print("KERNEL_OK")
</pallas_src>

<mosaic_0001>
module attributes {stable_mosaic.version = 11 : i64} {
  func.func @_model_kernel(%arg0: i32, %arg1: memref<1x2x16xi32, #tpu.memory_space<vmem>>, %arg2: memref<256x256xbf16, #tpu.memory_space<vmem>>, %arg3: memref<1x256xf32, #tpu.memory_space<vmem>>, %arg4: memref<1x2x256xf32, #tpu.memory_space<vmem>>) attributes {dimension_semantics = [#tpu.dimension_semantics<parallel>], iteration_bounds = array<i64: 1>, scalar_prefetch = 0 : i64, scratch_operands = 0 : i64, tpu.core_type = #tpu.core_type<tc>, window_params = [{transform_indices = @transform_0, window_bounds = array<i64: 1, 2, 16>}, {pipeline_mode = #tpu.pipeline_mode<synchronous>, transform_indices = @transform_1, window_bounds = array<i64: 256, 256>}, {pipeline_mode = #tpu.pipeline_mode<synchronous>, transform_indices = @transform_2, window_bounds = array<i64: 1, 256>}, {transform_indices = @transform_3, window_bounds = array<i64: 1, 2, 256>}]} {
    %c0 = arith.constant 0 : index
    %c0_0 = arith.constant 0 : index
    %c0_1 = arith.constant 0 : index
    %0 = vector.load %arg1[%c0, %c0_0, %c0_1] : memref<1x2x16xi32, #tpu.memory_space<vmem>>, vector<1x2x16xi32>
    %1 = vector.shape_cast %0 : vector<1x2x16xi32> to vector<2x16xi32>
    %2 = tpu.iota {dimensions = array<i32: 1>} : vector<2x256xi32>
    %3 = vector.extract_strided_slice %1 {offsets = [0, 0], sizes = [2, 1], strides = [1, 1]} : vector<2x16xi32> to vector<2x1xi32>
    %4 = vector.broadcast %3 : vector<2x1xi32> to vector<2x256xi32>
    %5 = arith.cmpi eq, %2, %4 : vector<2x256xi32>
    %6 = vector.extract_strided_slice %1 {offsets = [0, 1], sizes = [2, 1], strides = [1, 1]} : vector<2x16xi32> to vector<2x1xi32>
    %7 = vector.broadcast %6 : vector<2x1xi32> to vector<2x256xi32>
    %8 = arith.cmpi eq, %2, %7 : vector<2x256xi32>
    %9 = arith.ori %5, %8 : vector<2x256xi1>
    %10 = vector.extract_strided_slice %1 {offsets = [0, 2], sizes = [2, 1], strides = [1, 1]} : vector<2x16xi32> to vector<2x1xi32>
    %11 = vector.broadcast %10 : vector<2x1xi32> to vector<2x256xi32>
    %12 = arith.cmpi eq, %2, %11 : vector<2x256xi32>
    %13 = arith.ori %9, %12 : vector<2x256xi1>
    %14 = vector.extract_strided_slice %1 {offsets = [0, 3], sizes = [2, 1], strides = [1, 1]} : vector<2x16xi32> to vector<2x1xi32>
    %15 = vector.broadcast %14 : vector<2x1xi32> to vector<2x256xi32>
    %16 = arith.cmpi eq, %2, %15 : vector<2x256xi32>
    %17 = arith.ori %13, %16 : vector<2x256xi1>
    %18 = vector.extract_strided_slice %1 {offsets = [0, 4], sizes = [2, 1], strides = [1, 1]} : vector<2x16xi32> to vector<2x1xi32>
    %19 = vector.broadcast %18 : vector<2x1xi32> to vector<2x256xi32>
    %20 = arith.cmpi eq, %2, %19 : vector<2x256xi32>
    %21 = arith.ori %17, %20 : vector<2x256xi1>
    %22 = vector.extract_strided_slice %1 {offsets = [0, 5], sizes = [2, 1], strides = [1, 1]} : vector<2x16xi32> to vector<2x1xi32>
    %23 = vector.broadcast %22 : vector<2x1xi32> to vector<2x256xi32>
    %24 = arith.cmpi eq, %2, %23 : vector<2x256xi32>
    %25 = arith.ori %21, %24 : vector<2x256xi1>
    %26 = vector.extract_strided_slice %1 {offsets = [0, 6], sizes = [2, 1], strides = [1, 1]} : vector<2x16xi32> to vector<2x1xi32>
    %27 = vector.broadcast %26 : vector<2x1xi32> to vector<2x256xi32>
    %28 = arith.cmpi eq, %2, %27 : vector<2x256xi32>
    %29 = arith.ori %25, %28 : vector<2x256xi1>
    %30 = vector.extract_strided_slice %1 {offsets = [0, 7], sizes = [2, 1], strides = [1, 1]} : vector<2x16xi32> to vector<2x1xi32>
    %31 = vector.broadcast %30 : vector<2x1xi32> to vector<2x256xi32>
    %32 = arith.cmpi eq, %2, %31 : vector<2x256xi32>
    %33 = arith.ori %29, %32 : vector<2x256xi1>
    %34 = vector.extract_strided_slice %1 {offsets = [0, 8], sizes = [2, 1], strides = [1, 1]} : vector<2x16xi32> to vector<2x1xi32>
    %35 = vector.broadcast %34 : vector<2x1xi32> to vector<2x256xi32>
    %36 = arith.cmpi eq, %2, %35 : vector<2x256xi32>
    %37 = arith.ori %33, %36 : vector<2x256xi1>
    %38 = vector.extract_strided_slice %1 {offsets = [0, 9], sizes = [2, 1], strides = [1, 1]} : vector<2x16xi32> to vector<2x1xi32>
    %39 = vector.broadcast %38 : vector<2x1xi32> to vector<2x256xi32>
    %40 = arith.cmpi eq, %2, %39 : vector<2x256xi32>
    %41 = arith.ori %37, %40 : vector<2x256xi1>
    %42 = vector.extract_strided_slice %1 {offsets = [0, 10], sizes = [2, 1], strides = [1, 1]} : vector<2x16xi32> to vector<2x1xi32>
    %43 = vector.broadcast %42 : vector<2x1xi32> to vector<2x256xi32>
    %44 = arith.cmpi eq, %2, %43 : vector<2x256xi32>
    %45 = arith.ori %41, %44 : vector<2x256xi1>
    %46 = vector.extract_strided_slice %1 {offsets = [0, 11], sizes = [2, 1], strides = [1, 1]} : vector<2x16xi32> to vector<2x1xi32>
    %47 = vector.broadcast %46 : vector<2x1xi32> to vector<2x256xi32>
    %48 = arith.cmpi eq, %2, %47 : vector<2x256xi32>
    %49 = arith.ori %45, %48 : vector<2x256xi1>
    %50 = vector.extract_strided_slice %1 {offsets = [0, 12], sizes = [2, 1], strides = [1, 1]} : vector<2x16xi32> to vector<2x1xi32>
    %51 = vector.broadcast %50 : vector<2x1xi32> to vector<2x256xi32>
    %52 = arith.cmpi eq, %2, %51 : vector<2x256xi32>
    %53 = arith.ori %49, %52 : vector<2x256xi1>
    %54 = vector.extract_strided_slice %1 {offsets = [0, 13], sizes = [2, 1], strides = [1, 1]} : vector<2x16xi32> to vector<2x1xi32>
    %55 = vector.broadcast %54 : vector<2x1xi32> to vector<2x256xi32>
    %56 = arith.cmpi eq, %2, %55 : vector<2x256xi32>
    %57 = arith.ori %53, %56 : vector<2x256xi1>
    %58 = vector.extract_strided_slice %1 {offsets = [0, 14], sizes = [2, 1], strides = [1, 1]} : vector<2x16xi32> to vector<2x1xi32>
    %59 = vector.broadcast %58 : vector<2x1xi32> to vector<2x256xi32>
    %60 = arith.cmpi eq, %2, %59 : vector<2x256xi32>
    %61 = arith.ori %57, %60 : vector<2x256xi1>
    %62 = vector.extract_strided_slice %1 {offsets = [0, 15], sizes = [2, 1], strides = [1, 1]} : vector<2x16xi32> to vector<2x1xi32>
    %63 = vector.broadcast %62 : vector<2x1xi32> to vector<2x256xi32>
    %64 = arith.cmpi eq, %2, %63 : vector<2x256xi32>
    %65 = arith.ori %61, %64 : vector<2x256xi1>
    %66 = arith.extui %65 : vector<2x256xi1> to vector<2x256xi32>
    %67 = arith.sitofp %66 : vector<2x256xi32> to vector<2x256xf32>
    %68 = arith.truncf %67 : vector<2x256xf32> to vector<2x256xbf16>
    %c0_2 = arith.constant 0 : index
    %c0_3 = arith.constant 0 : index
    %69 = vector.load %arg2[%c0_2, %c0_3] : memref<256x256xbf16, #tpu.memory_space<vmem>>, vector<256x256xbf16>
    %cst = arith.constant dense<0.000000e+00> : vector<2x256xf32>
    %70 = tpu.matmul %68, %69, %cst {dimension_numbers = #tpu.dot_dimension_numbers<[1], [0], [0], [1], [0, 0, 1, 1], [], []>} : vector<2x256xbf16>, vector<256x256xbf16>, vector<2x256xf32> -> vector<2x256xf32>
    %c0_4 = arith.constant 0 : index
    %c0_5 = arith.constant 0 : index
    %71 = vector.load %arg3[%c0_4, %c0_5] : memref<1x256xf32, #tpu.memory_space<vmem>>, vector<1x256xf32>
    %72 = vector.broadcast %71 : vector<1x256xf32> to vector<2x256xf32>
    %73 = arith.addf %70, %72 : vector<2x256xf32>
    %c0_6 = arith.constant 0 : index
    %c0_7 = arith.constant 0 : index
    %c0_8 = arith.constant 0 : index
    %74 = vector.load %arg4[%c0_6, %c0_7, %c0_8] : memref<1x2x256xf32, #tpu.memory_space<vmem>>, vector<1x2x256xf32>
    %75 = vector.shape_cast %74 : vector<1x2x256xf32> to vector<2x256xf32>
    %76 = vector.shape_cast %73 : vector<2x256xf32> to vector<1x2x256xf32>
    tpu.vector_store %arg4[%c0_6, %c0_7, %c0_8], %76 {strides = array<i32>} : memref<1x2x256xf32, #tpu.memory_space<vmem>>, vector<1x2x256xf32>,
    return
  }
  func.func @transform_0(%arg0: i32) -> (i32, i32, i32) {
    %c0_i32 = arith.constant 0 : i32
    %c0_i32_0 = arith.constant 0 : i32
    %c0_i32_1 = arith.constant 0 : i32
    return %arg0, %c0_i32, %c0_i32_0 : i32, i32, i32
  }
  func.func @transform_1(%arg0: i32) -> (i32, i32) {
    %c0_i32 = arith.constant 0 : i32
    %c0_i32_0 = arith.constant 0 : i32
    %c0_i32_1 = arith.constant 0 : i32
    return %c0_i32, %c0_i32_0 : i32, i32
  }
  func.func @transform_2(%arg0: i32) -> (i32, i32) {
    %c0_i32 = arith.constant 0 : i32
    %c0_i32_0 = arith.constant 0 : i32
    %c0_i32_1 = arith.constant 0 : i32
    return %c0_i32, %c0_i32_0 : i32, i32
  }
  func.func @transform_3(%arg0: i32) -> (i32, i32, i32) {
    %c0_i32 = arith.constant 0 : i32
    %c0_i32_0 = arith.constant 0 : i32
    %c0_i32_1 = arith.constant 0 : i32
    return %arg0, %c0_i32, %c0_i32_0 : i32, i32, i32
  }
}

</mosaic_0001>

<llo_original>
// kernel: tpu_custom_call.1
$region0: #{tpu_custom_call.1}
  #allocation0 [shape = 'u32[]', space=smem, size = 0x4, offset = 0x4, fixed_abs, tag = 'smem constant byte address 0x4 - core index']
  #allocation1 [shape = 'u32[144,128]{1,0:T(1,128)}', space=vmem, size = 0x12000, scoped, tag = 'internal scratch']
  %s0 = inlined_call_operand.hbm [shape: s32[1,2,16], index: 0, kind: input, shape index: {}]
  %s1 = inlined_call_operand.hbm [shape: bf16[256,256], index: 1, kind: input, shape index: {}]
  %s2 = inlined_call_operand.vmem [shape: f32[1,256], index: 2, kind: input, shape index: {}]
  %s3 = inlined_call_operand.hbm [shape: f32[1,2,256], index: 3, kind: output, shape index: {}]
  %s4 = sld [smem:[#allocation0]]
  $region30: #{tpu_custom_call.1} parent=0
    _
  %s6 = ssub.s32 1, %s4
  %s7 = scalar_select 0, %s6, %s4
  $region1: #{tpu_custom_call.1} parent=0
    #allocation2 [shape = 'u8[1024]{0}', space=vmem, size = 0x400, scoped, tag = 'input window, operand 0, single buffered']
    #allocation3 [shape = 's32[1]{0}', space=sflag, size = 0x4, scoped, tag = 'scoped memory for tpu_custom_call.1']
    #allocation4 [shape = 's32[1]{0}', space=sflag, size = 0x4, scoped, tag = 'scoped memory for tpu_custom_call.1']
    #allocation5 [shape = 'u8[131072]{0}', space=vmem, size = 0x20000, scoped, tag = 'input window, operand 1, single buffered']
    #allocation6 [shape = 's32[1]{0}', space=sflag, size = 0x4, scoped, tag = 'scoped memory for tpu_custom_call.1']
    #allocation7 [shape = 'u8[2048]{0}', space=vmem, size = 0x800, scoped, tag = 'output window, operand 0, single buffered']
    %8 = vsyncpa [#allocation3], 0
    %9 = vsyncpa [#allocation6], 0
    %10 = vsyncpa [#allocation4], 0
    // Predicated region
    $region2: #{tpu_custom_call.1} parent=1 // pred_check
      _
    $region3: #{tpu_custom_call.1} parent=1 // pred_check_branch
      %12 = sbr.rel (0) target = $region5
    $region4: #{tpu_custom_call.1} parent=1 // pred_region
      %s14 = ssub.s32 32, 32
      %15 = vsyncadd [#allocation3], %s14
      %s17 = sshll.u32 [#allocation2], 4
      %s18 = int_to_ptr.vmem [resolvable:$true] %s17
      %20 = dma.hbm_to_vmem [thread:$0]  %s0, 32, %s18, [#allocation3]
    $region5: #{tpu_custom_call.1} parent=1 // pred_fallthru
      _
    // Predicated region
    $region6: #{tpu_custom_call.1} parent=1 // pred_check
      _
    $region7: #{tpu_custom_call.1} parent=1 // pred_check_branch
      %22 = sbr.rel (0) target = $region9
    $region8: #{tpu_custom_call.1} parent=1 // pred_region
      %s24 = ssub.s32 4096, 4096
      %25 = vsyncadd [#allocation6], %s24
      %s26 = sshll.u32 [#allocation5], 4
      %s27 = int_to_ptr.vmem [resolvable:$true] %s26
      %32 = dma.hbm_to_vmem [thread:$0]  %s1, 4096, %s27, [#allocation6], 128, 128, 8
    $region9: #{tpu_custom_call.1} parent=1 // pred_fallthru
      _
    // Predicated region
    $region10: #{tpu_custom_call.1} parent=1 // pred_check
      _
    $region11: #{tpu_custom_call.1} parent=1 // pred_check_branch
      %34 = sbr.rel (0) target = $region13
    $region12: #{tpu_custom_call.1} parent=1 // pred_region
      _
    $region13: #{tpu_custom_call.1} parent=1 // pred_fallthru
      _
    // Predicated region
    $region14: #{tpu_custom_call.1} parent=1 // pred_check
      _
    $region15: #{tpu_custom_call.1} parent=1 // pred_check_branch
      %36 = sbr.rel (0) target = $region17
    $region16: #{tpu_custom_call.1} parent=1 // pred_region
      %37 = dma.done [#allocation3], 32
    $region17: #{tpu_custom_call.1} parent=1 // pred_fallthru
      _
    // Predicated region
    $region18: #{tpu_custom_call.1} parent=1 // pred_check
      _
    $region19: #{tpu_custom_call.1} parent=1 // pred_check_branch
      %39 = sbr.rel (0) target = $region21
    $region20: #{tpu_custom_call.1} parent=1 // pred_region
      %40 = dma.done [#allocation6], 4096
    $region21: #{tpu_custom_call.1} parent=1 // pred_fallthru
      _
    %v41 = vld [vmem:[#allocation2] sm:$0x3]
    %v42 = vlaneseq
    %v43 = vand.u32 %v42, 127
    %v44 = vadd.s32 %v43, 128
    %45 = vset.pattern.permute.xlu0 0
    %46 = vperm.xlu0 %45, %v41
    %v47 = vpop.permute.xlu0 %46
    %vm48 = vcmp.eq.s32.totalorder %v43, %v47
    %vm49 = vcmp.eq.s32.totalorder %v44, %v47
    %50 = vset.pattern.permute.xlu0 1
    %51 = vperm.xlu0 %50, %v41
    %v52 = vpop.permute.xlu0 %51
    %vm53 = vcmp.eq.s32.totalorder %v43, %v52
    %vm54 = vcmp.eq.s32.totalorder %v44, %v52
    %vm55 = vmor %vm48, %vm53
    %vm56 = vmor %vm49, %vm54
    %57 = vset.pattern.permute.xlu0 2
    %58 = vperm.xlu0 %57, %v41
    %v59 = vpop.permute.xlu0 %58
    %vm60 = vcmp.eq.s32.totalorder %v43, %v59
    %vm61 = vcmp.eq.s32.totalorder %v44, %v59
    %vm62 = vmor %vm55, %vm60
    %vm63 = vmor %vm56, %vm61
    %64 = vset.pattern.permute.xlu0 3
    %65 = vperm.xlu0 %64, %v41
    %v66 = vpop.permute.xlu0 %65
    %vm67 = vcmp.eq.s32.totalorder %v43, %v66
    %vm68 = vcmp.eq.s32.totalorder %v44, %v66
    %vm69 = vmor %vm62, %vm67
    %vm70 = vmor %vm63, %vm68
    %71 = vset.pattern.permute.xlu0 4
    %72 = vperm.xlu0 %71, %v41
    %v73 = vpop.permute.xlu0 %72
    %vm74 = vcmp.eq.s32.totalorder %v43, %v73
    %vm75 = vcmp.eq.s32.totalorder %v44, %v73
    %vm76 = vmor %vm69, %vm74
    %vm77 = vmor %vm70, %vm75
    %78 = vset.pattern.permute.xlu0 5
    %79 = vperm.xlu0 %78, %v41
    %v80 = vpop.permute.xlu0 %79
    %vm81 = vcmp.eq.s32.totalorder %v43, %v80
    %vm82 = vcmp.eq.s32.totalorder %v44, %v80
    %vm83 = vmor %vm76, %vm81
    %vm84 = vmor %vm77, %vm82
    %85 = vset.pattern.permute.xlu0 6
    %86 = vperm.xlu0 %85, %v41
    %v87 = vpop.permute.xlu0 %86
    %vm88 = vcmp.eq.s32.totalorder %v43, %v87
    %vm89 = vcmp.eq.s32.totalorder %v44, %v87
    %vm90 = vmor %vm83, %vm88
    %vm91 = vmor %vm84, %vm89
    %92 = vset.pattern.permute.xlu0 7
    %93 = vperm.xlu0 %92, %v41
    %v94 = vpop.permute.xlu0 %93
    %vm95 = vcmp.eq.s32.totalorder %v43, %v94
    %vm96 = vcmp.eq.s32.totalorder %v44, %v94
    %vm97 = vmor %vm90, %vm95
    %vm98 = vmor %vm91, %vm96
    %99 = vset.pattern.permute.xlu0 8
    %100 = vperm.xlu0 %99, %v41
    %v101 = vpop.permute.xlu0 %100
    %vm102 = vcmp.eq.s32.totalorder %v43, %v101
    %vm103 = vcmp.eq.s32.totalorder %v44, %v101
    %vm104 = vmor %vm97, %vm102
    %vm105 = vmor %vm98, %vm103
    %106 = vset.pattern.permute.xlu0 9
    %107 = vperm.xlu0 %106, %v41
    %v108 = vpop.permute.xlu0 %107
    %vm109 = vcmp.eq.s32.totalorder %v43, %v108
    %vm110 = vcmp.eq.s32.totalorder %v44, %v108
    %vm111 = vmor %vm104, %vm109
    %vm112 = vmor %vm105, %vm110
    %113 = vset.pattern.permute.xlu0 10
    %114 = vperm.xlu0 %113, %v41
    %v115 = vpop.permute.xlu0 %114
    %vm116 = vcmp.eq.s32.totalorder %v43, %v115
    %vm117 = vcmp.eq.s32.totalorder %v44, %v115
    %vm118 = vmor %vm111, %vm116
    %vm119 = vmor %vm112, %vm117
    %120 = vset.pattern.permute.xlu0 11
    %121 = vperm.xlu0 %120, %v41
    %v122 = vpop.permute.xlu0 %121
    %vm123 = vcmp.eq.s32.totalorder %v43, %v122
    %vm124 = vcmp.eq.s32.totalorder %v44, %v122
    %vm125 = vmor %vm118, %vm123
    %vm126 = vmor %vm119, %vm124
    %127 = vset.pattern.permute.xlu0 12
    %128 = vperm.xlu0 %127, %v41
    %v129 = vpop.permute.xlu0 %128
    %vm130 = vcmp.eq.s32.totalorder %v43, %v129
    %vm131 = vcmp.eq.s32.totalorder %v44, %v129
    %vm132 = vmor %vm125, %vm130
    %vm133 = vmor %vm126, %vm131
    %134 = vset.pattern.permute.xlu0 13
    %135 = vperm.xlu0 %134, %v41
    %v136 = vpop.permute.xlu0 %135
    %vm137 = vcmp.eq.s32.totalorder %v43, %v136
    %vm138 = vcmp.eq.s32.totalorder %v44, %v136
    %vm139 = vmor %vm132, %vm137
    %vm140 = vmor %vm133, %vm138
    %141 = vset.pattern.permute.xlu0 14
    %142 = vperm.xlu0 %141, %v41
    %v143 = vpop.permute.xlu0 %142
    %vm144 = vcmp.eq.s32.totalorder %v43, %v143
    %vm145 = vcmp.eq.s32.totalorder %v44, %v143
    %vm146 = vmor %vm139, %vm144
    %vm147 = vmor %vm140, %vm145
    %148 = vset.pattern.permute.xlu0 15
    %149 = vperm.xlu0 %148, %v41
    %v150 = vpop.permute.xlu0 %149
    %vm151 = vcmp.eq.s32.totalorder %v43, %v150
    %vm152 = vcmp.eq.s32.totalorder %v44, %v150
    %vm153 = vmor %vm146, %vm151
    %vm154 = vmor %vm147, %vm152
    %v155 = vsel %vm153, 1, 0
    %v156 = vsel %vm154, 1, 0
    %v157 = vcvt.s32.f32 %v155
    %v158 = vcvt.s32.f32 %v156
    %v159 = vpack.c.bf16 %v157, %v157
    %v160 = vpack.c.bf16 %v158, %v158
    %v161 = vld [vmem:[#allocation5] sm:$0xff]
    %v162 = vld [vmem:[#allocation5 + $0x8] sm:$0xff]
    %v163 = vld [vmem:[#allocation5 + $0x10] sm:$0xff]
    %v164 = vld [vmem:[#allocation5 + $0x18] sm:$0xff]
    %v165 = vld [vmem:[#allocation5 + $0x20] sm:$0xff]
    %v166 = vld [vmem:[#allocation5 + $0x28] sm:$0xff]
    %v167 = vld [vmem:[#allocation5 + $0x30] sm:$0xff]
    %v168 = vld [vmem:[#allocation5 + $0x38] sm:$0xff]
    %v169 = vld [vmem:[#allocation5 + $0x40] sm:$0xff]
    %v170 = vld [vmem:[#allocation5 + $0x48] sm:$0xff]
    %v171 = vld [vmem:[#allocation5 + $0x50] sm:$0xff]
    %v172 = vld [vmem:[#allocation5 + $0x58] sm:$0xff]
    %v173 = vld [vmem:[#allocation5 + $0x60] sm:$0xff]
    %v174 = vld [vmem:[#allocation5 + $0x68] sm:$0xff]
    %v175 = vld [vmem:[#allocation5 + $0x70] sm:$0xff]
    %v176 = vld [vmem:[#allocation5 + $0x78] sm:$0xff]
    %v177 = vld [vmem:[#allocation5 + $0x80] sm:$0xff]
    %v178 = vld [vmem:[#allocation5 + $0x88] sm:$0xff]
    %v179 = vld [vmem:[#allocation5 + $0x90] sm:$0xff]
    %v180 = vld [vmem:[#allocation5 + $0x98] sm:$0xff]
    %v181 = vld [vmem:[#allocation5 + $0xa0] sm:$0xff]
    %v182 = vld [vmem:[#allocation5 + $0xa8] sm:$0xff]
    %v183 = vld [vmem:[#allocation5 + $0xb0] sm:$0xff]
    %v184 = vld [vmem:[#allocation5 + $0xb8] sm:$0xff]
    %v185 = vld [vmem:[#allocation5 + $0xc0] sm:$0xff]
    %v186 = vld [vmem:[#allocation5 + $0xc8] sm:$0xff]
    %v187 = vld [vmem:[#allocation5 + $0xd0] sm:$0xff]
    %v188 = vld [vmem:[#allocation5 + $0xd8] sm:$0xff]
    %v189 = vld [vmem:[#allocation5 + $0xe0] sm:$0xff]
    %v190 = vld [vmem:[#allocation5 + $0xe8] sm:$0xff]
    %v191 = vld [vmem:[#allocation5 + $0xf0] sm:$0xff]
    %v192 = vld [vmem:[#allocation5 + $0xf8] sm:$0xff]
    %v193 = vld [vmem:[%s2] sm:$0x3]
    %v195 = vlaneseq
    %v196 = vshrl.u32 %v195, 7
    %v197 = vsub.s32 0, %v196
    %v198 = vrot.slane %v193, %v197
    %v199 = vlaneseq
    %v200 = vshrl.u32 %v199, 7
    %v201 = vsub.s32 1, %v200
    %v202 = vrot.slane %v193, %v201
    %v237 = vunpack.c.l.b16 %v161
    %v238 = vunpack.c.h.b16 %v161
    %v239 = vunpack.c.l.b16 %v162
    %v240 = vunpack.c.h.b16 %v162
    %v241 = vunpack.c.l.b16 %v163
    %v242 = vunpack.c.h.b16 %v163
    %v243 = vunpack.c.l.b16 %v164
    %v244 = vunpack.c.h.b16 %v164
    %v245 = vunpack.c.l.b16 %v165
    %v246 = vunpack.c.h.b16 %v165
    %v247 = vunpack.c.l.b16 %v166
    %v248 = vunpack.c.h.b16 %v166
    %v249 = vunpack.c.l.b16 %v167
    %v250 = vunpack.c.h.b16 %v167
    %v251 = vunpack.c.l.b16 %v168
    %v252 = vunpack.c.h.b16 %v168
    %v253 = vunpack.c.l.b16 %v169
    %v254 = vunpack.c.h.b16 %v169
    %v255 = vunpack.c.l.b16 %v170
    %v256 = vunpack.c.h.b16 %v170
    %v257 = vunpack.c.l.b16 %v171
    %v258 = vunpack.c.h.b16 %v171
    %v259 = vunpack.c.l.b16 %v172
    %v260 = vunpack.c.h.b16 %v172
    %v261 = vunpack.c.l.b16 %v173
    %v262 = vunpack.c.h.b16 %v173
    %v263 = vunpack.c.l.b16 %v174
    %v264 = vunpack.c.h.b16 %v174
    %v265 = vunpack.c.l.b16 %v175
    %v266 = vunpack.c.h.b16 %v175
    %v267 = vunpack.c.l.b16 %v176
    %v268 = vunpack.c.h.b16 %v176
    %v269 = vunpack.c.l.b16 %v177
    %v270 = vunpack.c.h.b16 %v177
    %v271 = vunpack.c.l.b16 %v178
    %v272 = vunpack.c.h.b16 %v178
    %v273 = vunpack.c.l.b16 %v179
    %v274 = vunpack.c.h.b16 %v179
    %v275 = vunpack.c.l.b16 %v180
    %v276 = vunpack.c.h.b16 %v180
    %v277 = vunpack.c.l.b16 %v181
    %v278 = vunpack.c.h.b16 %v181
    %v279 = vunpack.c.l.b16 %v182
    %v280 = vunpack.c.h.b16 %v182
    %v281 = vunpack.c.l.b16 %v183
    %v282 = vunpack.c.h.b16 %v183
    %v283 = vunpack.c.l.b16 %v184
    %v284 = vunpack.c.h.b16 %v184
    %v285 = vunpack.c.l.b16 %v185
    %v286 = vunpack.c.h.b16 %v185
    %v287 = vunpack.c.l.b16 %v186
    %v288 = vunpack.c.h.b16 %v186
    %v289 = vunpack.c.l.b16 %v187
    %v290 = vunpack.c.h.b16 %v187
    %v291 = vunpack.c.l.b16 %v188
    %v292 = vunpack.c.h.b16 %v188
    %v293 = vunpack.c.l.b16 %v189
    %v294 = vunpack.c.h.b16 %v189
    %v295 = vunpack.c.l.b16 %v190
    %v296 = vunpack.c.h.b16 %v190
    %v297 = vunpack.c.l.b16 %v191
    %v298 = vunpack.c.h.b16 %v191
    %v299 = vunpack.c.l.b16 %v192
    %v300 = vunpack.c.h.b16 %v192
    %v301 = vpack.c.b16 %v239, %v237
    %v302 = vpack.c.b16 %v240, %v238
    %v303 = vpack.c.b16 %v243, %v241
    %v304 = vpack.c.b16 %v244, %v242
    %v305 = vpack.c.b16 %v247, %v245
    %v306 = vpack.c.b16 %v248, %v246
    %v307 = vpack.c.b16 %v251, %v249
    %v308 = vpack.c.b16 %v252, %v250
    %v309 = vpack.c.b16 %v255, %v253
    %v310 = vpack.c.b16 %v256, %v254
    %v311 = vpack.c.b16 %v259, %v257
    %v312 = vpack.c.b16 %v260, %v258
    %v313 = vpack.c.b16 %v263, %v261
    %v314 = vpack.c.b16 %v264, %v262
    %v315 = vpack.c.b16 %v267, %v265
    %v316 = vpack.c.b16 %v268, %v266
    %v317 = vpack.c.b16 %v271, %v269
    %v318 = vpack.c.b16 %v272, %v270
    %v319 = vpack.c.b16 %v275, %v273
    %v320 = vpack.c.b16 %v276, %v274
    %v321 = vpack.c.b16 %v279, %v277
    %v322 = vpack.c.b16 %v280, %v278
    %v323 = vpack.c.b16 %v283, %v281
    %v324 = vpack.c.b16 %v284, %v282
    %v325 = vpack.c.b16 %v287, %v285
    %v326 = vpack.c.b16 %v288, %v286
    %v327 = vpack.c.b16 %v291, %v289
    %v328 = vpack.c.b16 %v292, %v290
    %v329 = vpack.c.b16 %v295, %v293
    %v330 = vpack.c.b16 %v296, %v294
    %v331 = vpack.c.b16 %v299, %v297
    %v332 = vpack.c.b16 %v300, %v298
    %365 = vmatprep.subr.bf16.mxu0 %v302
    %366 = vmatpush1.bf16.msra.mxu0 %v301
    %367 = vmatprep.subr.bf16.mxu0 %v304
    %368 = vmatpush1.bf16.msra.mxu0 %v303
    %369 = vmatprep.subr.bf16.mxu0 %v306
    %370 = vmatpush1.bf16.msra.mxu0 %v305
    %371 = vmatprep.subr.bf16.mxu0 %v308
    %372 = vmatpush1.bf16.msra.mxu0 %v307
    %373 = vmatprep.subr.bf16.mxu0 %v310
    %374 = vmatpush1.bf16.msra.mxu0 %v309
    %375 = vmatprep.subr.bf16.mxu0 %v312
    %376 = vmatpush1.bf16.msra.mxu0 %v311
    %377 = vmatprep.subr.bf16.mxu0 %v314
    %378 = vmatpush1.bf16.msra.mxu0 %v313
    %379 = vmatprep.subr.bf16.mxu0 %v316
    %380 = vmatpush1.bf16.msra.mxu0 %v315
    %381 = vmatprep.subr.bf16.mxu0 %v318
    %382 = vmatpush1.bf16.msra.mxu0 %v317
    %383 = vmatprep.subr.bf16.mxu0 %v320
    %384 = vmatpush1.bf16.msra.mxu0 %v319
    %385 = vmatprep.subr.bf16.mxu0 %v322
    %386 = vmatpush1.bf16.msra.mxu0 %v321
    %387 = vmatprep.subr.bf16.mxu0 %v324
    %388 = vmatpush1.bf16.msra.mxu0 %v323
    %389 = vmatprep.subr.bf16.mxu0 %v326
    %390 = vmatpush1.bf16.msra.mxu0 %v325
    %391 = vmatprep.subr.bf16.mxu0 %v328
    %392 = vmatpush1.bf16.msra.mxu0 %v327
    %393 = vmatprep.subr.bf16.mxu0 %v330
    %394 = vmatpush1.bf16.msra.mxu0 %v329
    %395 = vmatprep.subr.bf16.mxu0 %v332
    %396 = vmatpush1.bf16.msra.mxu0 %v331
    %397 = vmatprep.mubr.bf16.mxu0 %v160
    %398 = vmatmul.mubr.bf16.gmra.mrb[0].mxu0 %v159
    %v399 = vpop.f32.mrb[0].mxu0
    %v400 = vadd.f32 %v198, %v399
    %v401 = vpop.f32.mrb[0].mxu0
    %v402 = vadd.f32 %v202, %v401
    %v403 = vpop.f32.mrb[0].mxu0
    %v404 = vpop.f32.mrb[0].mxu0
    %405 = vdwg.mxu0
    %v408 = vcombine.low %v400, %v402
    %v410 = vunpack.c.l.s4 1983009808
    %v411 = vunpack.c.0.s8 %v410
    %v412 = vlaneseq
    %v413 = vshrl.u32 %v412, 7
    %v414 = vsub.s32 %v411, %v413
    %v415 = vrot.slane %v408, %v414
    %417 = vst [vmem:[#allocation7] sm:$0xf] %v415
    // Predicated region
    $region22: #{tpu_custom_call.1} parent=1 // pred_check
      _
    $region23: #{tpu_custom_call.1} parent=1 // pred_check_branch
      %419 = sbr.rel (0) target = $region25
    $region24: #{tpu_custom_call.1} parent=1 // pred_region
      %s421 = ssub.s32 64, 64
      %422 = vsyncadd [#allocation4], %s421
      %s424 = sshll.u32 [#allocation7], 4
      %s425 = int_to_ptr.vmem [resolvable:$true] %s424
      %427 = dma.vmem_to_hbm [thread:$0]  %s425, 64, %s3, [#allocation4]
    $region25: #{tpu_custom_call.1} parent=1 // pred_fallthru
      _
    // Predicated region
    $region26: #{tpu_custom_call.1} parent=1 // pred_check
      _
    $region27: #{tpu_custom_call.1} parent=1 // pred_check_branch
      %429 = sbr.rel (0) target = $region29
    $region28: #{tpu_custom_call.1} parent=1 // pred_region
      %430 = dma.done [#allocation4], 64
    $region29: #{tpu_custom_call.1} parent=1 // pred_fallthru
      _
    %431 = vsyncpa [#allocation3], 1
    %432 = vsyncpa [#allocation6], 1
    %433 = vsyncpa [#allocation4], 1

</llo_original>
